<compile_context>
chip_gen: v6e
topology: v6e:2x2x1
jax: 0.10.0
libtpu: 0.0.40
codegen_flags: <defaults>
</compile_context>

<pallas_src>
import functools

import jax
import jax.numpy as jnp
from jax import lax
from jax.experimental import pallas as pl
from jax.experimental.pallas import tpu as pltpu


def _round_up(x, m):
    return (x + m - 1) // m * m


def mlp_logsoftmax_kernel(x_ref, w1_ref, b1_ref, w2_ref, b2_ref, o_ref, *,
                          n_classes):
    """Fused forward for one batch tile:
       hidden = relu(x @ W1 + b1); logits = hidden @ W2 + b2;
       out = log_softmax(logits, axis=1) with padded class lanes masked."""
    # Layer 1: bf16 MXU matmul, f32 accumulate; bias + ReLU in f32 (VPU).
    h = jnp.dot(x_ref[...], w1_ref[...], preferred_element_type=jnp.float32)
    h = jnp.maximum(h + b1_ref[...], 0.0)

    # Layer 2: feed the MXU bf16 again, accumulate in f32.
    logits = jnp.dot(h.astype(jnp.bfloat16), w2_ref[...],
                     preferred_element_type=jnp.float32)
    logits = logits + b2_ref[...]

    # Mask padded class lanes so they don't perturb max / sum-exp.
    col = lax.broadcasted_iota(jnp.int32, logits.shape, 1)
    logits = jnp.where(col < n_classes, logits, -1e30)

    # Numerically stable log-softmax over the class (lane) axis.
    m = jnp.max(logits, axis=-1, keepdims=True)
    shifted = logits - m
    lse = jnp.log(jnp.sum(jnp.exp(shifted), axis=-1, keepdims=True))
    o_ref[...] = shifted - lse


def one_layer_mlp(x, w1, b1, w2, b2):
    """x: (B, image_size) f32
       w1: (image_size, H), b1: (H,), w2: (H, C), b2: (C,)
    Returns (B, C) f32 log-probabilities matching the PyTorch forward."""
    B, D = x.shape
    H = w1.shape[1]
    C = w2.shape[1]

    LANE = 128
    Hp = _round_up(H, LANE)          # lane-dense hidden dim
    Cp = _round_up(C, LANE)          # lane-dense class dim (dense output store)

    # Batch tile: multiple of 16 (bf16 sublane packing). Large tiles amortise
    # the ~0.35us/step overhead; 256 keeps TB*(D+Hp+Cp) tiny vs 64 MiB VMEM
    # (v7x) even with double-buffering, and weights stay resident besides.
    TB = 256 if B >= 256 else _round_up(B, 16)
    Bp = _round_up(B, TB)

    # Zero-pad everything. Padded hidden units are exact: relu(0) = 0 and the
    # padded rows of W2 are zero, so they contribute nothing to the logits.
    xp = jnp.zeros((Bp, D), jnp.bfloat16).at[:B].set(x.astype(jnp.bfloat16))
    w1p = jnp.zeros((D, Hp), jnp.bfloat16).at[:, :H].set(w1.astype(jnp.bfloat16))
    b1p = jnp.zeros((1, Hp), jnp.float32).at[:, :H].set(b1.reshape(1, H))
    w2p = jnp.zeros((Hp, Cp), jnp.bfloat16).at[:H, :C].set(w2.astype(jnp.bfloat16))
    b2p = jnp.zeros((1, Cp), jnp.float32).at[:, :C].set(b2.reshape(1, C))

    kernel = functools.partial(mlp_logsoftmax_kernel, n_classes=C)

    cost = pl.CostEstimate(
        flops=2 * Bp * (D * Hp + Hp * Cp),
        transcendentals=Bp * Cp + Bp,                 # exp per logit + log per row
        bytes_accessed=2 * (Bp * D + D * Hp + Hp * Cp)   # bf16 traffic
                       + 4 * (Hp + Cp + Bp * Cp),        # f32 biases + output
    )

    out_padded = pl.pallas_call(
        kernel,
        out_shape=jax.ShapeDtypeStruct((Bp, Cp), jnp.float32),
        grid=(Bp // TB,),
        in_specs=[
            pl.BlockSpec((TB, D), lambda i: (i, 0)),   # x: streamed over batch
            pl.BlockSpec((D, Hp), lambda i: (0, 0)),   # W1: VMEM-resident
            pl.BlockSpec((1, Hp), lambda i: (0, 0)),   # b1: VMEM-resident
            pl.BlockSpec((Hp, Cp), lambda i: (0, 0)),  # W2: VMEM-resident
            pl.BlockSpec((1, Cp), lambda i: (0, 0)),   # b2: VMEM-resident
        ],
        out_specs=pl.BlockSpec((TB, Cp), lambda i: (i, 0)),
        compiler_params=pltpu.CompilerParams(
            dimension_semantics=("parallel",),         # megacore on v7x
        ),
        cost_estimate=cost,
    )(xp, w1p, b1p, w2p, b2p)

    # Slice away batch / class padding.
    return out_padded[:B, :C]


def init_params(key, image_size, nb_neurons, nb_classes):
    """Deterministic init mimicking nn.Linear default (uniform +/- 1/sqrt(fan_in)).
    Weights are stored as (in_features, out_features)."""
    k1, k2, k3, k4 = jax.random.split(key, 4)
    bound1 = 1.0 / jnp.sqrt(float(image_size))
    bound2 = 1.0 / jnp.sqrt(float(nb_neurons))
    w1 = jax.random.uniform(k1, (image_size, nb_neurons), jnp.float32,
                            minval=-bound1, maxval=bound1)
    b1 = jax.random.uniform(k2, (nb_neurons,), jnp.float32,
                            minval=-bound1, maxval=bound1)
    w2 = jax.random.uniform(k3, (nb_neurons, nb_classes), jnp.float32,
                            minval=-bound2, maxval=bound2)
    b2 = jax.random.uniform(k4, (nb_classes,), jnp.float32,
                            minval=-bound2, maxval=bound2)
    return w1, b1, w2, b2


if __name__ == "__main__":
    # Small shapes consistent with the module: flattened 16x16 images,
    # 16 hidden neurons, 4 classes, batch of 8.
    batch = 8
    height, width = 16, 16
    image_size = height * width          # 256
    nb_neurons = 16
    nb_classes = 4

    key = jax.random.PRNGKey(0)
    kx, kp = jax.random.split(key)
    x = jax.random.normal(kx, (batch, image_size), jnp.float32)
    w1, b1, w2, b2 = init_params(kp, image_size, nb_neurons, nb_classes)

    out = one_layer_mlp(x, w1, b1, w2, b2)
    out = jax.block_until_ready(out)

    # Pure-JAX reference following the same bf16-input / f32-accumulate path.
    xb = x.astype(jnp.bfloat16).astype(jnp.float32)
    w1b = w1.astype(jnp.bfloat16).astype(jnp.float32)
    w2b = w2.astype(jnp.bfloat16).astype(jnp.float32)
    h_ref = jnp.maximum(xb @ w1b + b1, 0.0)
    logits_ref = h_ref.astype(jnp.bfloat16).astype(jnp.float32) @ w2b + b2
    ref = jax.nn.log_softmax(logits_ref, axis=1)

    assert out.shape == (batch, nb_classes)
    assert jnp.allclose(out, ref, atol=2e-3, rtol=2e-3), (
        float(jnp.max(jnp.abs(out - ref))))

    print("KERNEL_OK")
</pallas_src>

<mosaic_0001>
module attributes {stable_mosaic.version = 11 : i64} {
  func.func @mlp_logsoftmax_kernel(%arg0: i32, %arg1: memref<16x256xbf16, #tpu.memory_space<vmem>>, %arg2: memref<256x128xbf16, #tpu.memory_space<vmem>>, %arg3: memref<1x128xf32, #tpu.memory_space<vmem>>, %arg4: memref<128x128xbf16, #tpu.memory_space<vmem>>, %arg5: memref<1x128xf32, #tpu.memory_space<vmem>>, %arg6: memref<16x128xf32, #tpu.memory_space<vmem>>) attributes {dimension_semantics = [#tpu.dimension_semantics<parallel>], iteration_bounds = array<i64: 1>, scalar_prefetch = 0 : i64, scratch_operands = 0 : i64, tpu.core_type = #tpu.core_type<tc>, window_params = [{transform_indices = @transform_0, window_bounds = array<i64: 16, 256>}, {pipeline_mode = #tpu.pipeline_mode<synchronous>, transform_indices = @transform_1, window_bounds = array<i64: 256, 128>}, {pipeline_mode = #tpu.pipeline_mode<synchronous>, transform_indices = @transform_2, window_bounds = array<i64: 1, 128>}, {pipeline_mode = #tpu.pipeline_mode<synchronous>, transform_indices = @transform_3, window_bounds = array<i64: 128, 128>}, {pipeline_mode = #tpu.pipeline_mode<synchronous>, transform_indices = @transform_4, window_bounds = array<i64: 1, 128>}, {transform_indices = @transform_5, window_bounds = array<i64: 16, 128>}]} {
    %c0 = arith.constant 0 : index
    %c0_0 = arith.constant 0 : index
    %0 = vector.load %arg1[%c0, %c0_0] : memref<16x256xbf16, #tpu.memory_space<vmem>>, vector<16x256xbf16>
    %c0_1 = arith.constant 0 : index
    %c0_2 = arith.constant 0 : index
    %1 = vector.load %arg2[%c0_1, %c0_2] : memref<256x128xbf16, #tpu.memory_space<vmem>>, vector<256x128xbf16>
    %cst = arith.constant dense<0.000000e+00> : vector<16x128xf32>
    %2 = tpu.matmul %0, %1, %cst {dimension_numbers = #tpu.dot_dimension_numbers<[1], [0], [0], [1], [0, 0, 1, 1], [], []>} : vector<16x256xbf16>, vector<256x128xbf16>, vector<16x128xf32> -> vector<16x128xf32>
    %c0_3 = arith.constant 0 : index
    %c0_4 = arith.constant 0 : index
    %3 = vector.load %arg3[%c0_3, %c0_4] : memref<1x128xf32, #tpu.memory_space<vmem>>, vector<1x128xf32>
    %4 = vector.broadcast %3 : vector<1x128xf32> to vector<16x128xf32>
    %5 = arith.addf %2, %4 : vector<16x128xf32>
    %cst_5 = arith.constant 0.000000e+00 : f32
    %6 = vector.broadcast %cst_5 : f32 to vector<16x128xf32>
    %7 = arith.maximumf %5, %6 : vector<16x128xf32>
    %8 = arith.truncf %7 : vector<16x128xf32> to vector<16x128xbf16>
    %c0_6 = arith.constant 0 : index
    %c0_7 = arith.constant 0 : index
    %9 = vector.load %arg4[%c0_6, %c0_7] : memref<128x128xbf16, #tpu.memory_space<vmem>>, vector<128x128xbf16>
    %cst_8 = arith.constant dense<0.000000e+00> : vector<16x128xf32>
    %10 = tpu.matmul %8, %9, %cst_8 {dimension_numbers = #tpu.dot_dimension_numbers<[1], [0], [0], [1], [0, 0, 1, 1], [], []>} : vector<16x128xbf16>, vector<128x128xbf16>, vector<16x128xf32> -> vector<16x128xf32>
    %c0_9 = arith.constant 0 : index
    %c0_10 = arith.constant 0 : index
    %11 = vector.load %arg5[%c0_9, %c0_10] : memref<1x128xf32, #tpu.memory_space<vmem>>, vector<1x128xf32>
    %12 = vector.broadcast %11 : vector<1x128xf32> to vector<16x128xf32>
    %13 = arith.addf %10, %12 : vector<16x128xf32>
    %14 = tpu.iota {dimensions = array<i32: 1>} : vector<16x128xi32>
    %c4_i32 = arith.constant 4 : i32
    %15 = vector.broadcast %c4_i32 : i32 to vector<16x128xi32>
    %16 = arith.cmpi slt, %14, %15 : vector<16x128xi32>
    %cst_11 = arith.constant -1.000000e+30 : f32
    %17 = vector.broadcast %cst_11 : f32 to vector<16x128xf32>
    %18 = arith.select %16, %13, %17 : vector<16x128xi1>, vector<16x128xf32>
    %cst_12 = arith.constant dense<0xFF800000> : vector<16xf32>
    %19 = vector.multi_reduction <maximumf>, %18, %cst_12 [1] : vector<16x128xf32> to vector<16xf32>
    %20 = vector.shape_cast %19 : vector<16xf32> to vector<16x1xf32>
    %21 = vector.broadcast %20 : vector<16x1xf32> to vector<16x128xf32>
    %22 = arith.subf %18, %21 : vector<16x128xf32>
    %23 = math.exp %22 : vector<16x128xf32>
    %cst_13 = arith.constant dense<0.000000e+00> : vector<16xf32>
    %24 = vector.multi_reduction <add>, %23, %cst_13 [1] : vector<16x128xf32> to vector<16xf32>
    %25 = vector.shape_cast %24 : vector<16xf32> to vector<16x1xf32>
    %26 = math.log %25 : vector<16x1xf32>
    %27 = vector.broadcast %26 : vector<16x1xf32> to vector<16x128xf32>
    %28 = arith.subf %22, %27 : vector<16x128xf32>
    %c0_14 = arith.constant 0 : index
    %c0_15 = arith.constant 0 : index
    %29 = vector.load %arg6[%c0_14, %c0_15] : memref<16x128xf32, #tpu.memory_space<vmem>>, vector<16x128xf32>
    tpu.vector_store %arg6[%c0_14, %c0_15], %28 {strides = array<i32>} : memref<16x128xf32, #tpu.memory_space<vmem>>, vector<16x128xf32>,
    return
  }
  func.func @transform_0(%arg0: i32) -> (i32, i32) {
    %c0_i32 = arith.constant 0 : i32
    %c0_i32_0 = arith.constant 0 : i32
    return %arg0, %c0_i32 : i32, i32
  }
  func.func @transform_1(%arg0: i32) -> (i32, i32) {
    %c0_i32 = arith.constant 0 : i32
    %c0_i32_0 = arith.constant 0 : i32
    %c0_i32_1 = arith.constant 0 : i32
    return %c0_i32, %c0_i32_0 : i32, i32
  }
  func.func @transform_2(%arg0: i32) -> (i32, i32) {
    %c0_i32 = arith.constant 0 : i32
    %c0_i32_0 = arith.constant 0 : i32
    %c0_i32_1 = arith.constant 0 : i32
    return %c0_i32, %c0_i32_0 : i32, i32
  }
  func.func @transform_3(%arg0: i32) -> (i32, i32) {
    %c0_i32 = arith.constant 0 : i32
    %c0_i32_0 = arith.constant 0 : i32
    %c0_i32_1 = arith.constant 0 : i32
    return %c0_i32, %c0_i32_0 : i32, i32
  }
  func.func @transform_4(%arg0: i32) -> (i32, i32) {
    %c0_i32 = arith.constant 0 : i32
    %c0_i32_0 = arith.constant 0 : i32
    %c0_i32_1 = arith.constant 0 : i32
    return %c0_i32, %c0_i32_0 : i32, i32
  }
  func.func @transform_5(%arg0: i32) -> (i32, i32) {
    %c0_i32 = arith.constant 0 : i32
    %c0_i32_0 = arith.constant 0 : i32
    return %arg0, %c0_i32 : i32, i32
  }
}

</mosaic_0001>

<llo_original>
// kernel: tpu_custom_call.1
$region0: #{tpu_custom_call.1}
  #allocation0 [shape = 'u32[]', space=smem, size = 0x4, offset = 0x4, fixed_abs, tag = 'smem constant byte address 0x4 - core index']
  #allocation1 [shape = 'u32[144,128]{1,0:T(1,128)}', space=vmem, size = 0x12000, scoped, tag = 'internal scratch']
  %s0 = inlined_call_operand.hbm [shape: bf16[16,256], index: 0, kind: input, shape index: {}]
  %s1 = inlined_call_operand.hbm [shape: bf16[256,128], index: 1, kind: input, shape index: {}]
  %s2 = inlined_call_operand.vmem [shape: f32[1,128], index: 2, kind: input, shape index: {}]
  %s3 = inlined_call_operand.hbm [shape: bf16[128,128], index: 3, kind: input, shape index: {}]
  %s4 = inlined_call_operand.vmem [shape: f32[1,128], index: 4, kind: input, shape index: {}]
  %s5 = inlined_call_operand.hbm [shape: f32[16,128], index: 5, kind: output, shape index: {}]
  %s6 = sld [smem:[#allocation0]]
  $region42: #{tpu_custom_call.1} parent=0
    _
  %s8 = ssub.s32 1, %s6
  %s9 = scalar_select 0, %s8, %s6
  $region1: #{tpu_custom_call.1} parent=0
    #allocation2 [shape = 'u8[8192]{0}', space=vmem, size = 0x2000, scoped, tag = 'input window, operand 0, single buffered']
    #allocation3 [shape = 's32[1]{0}', space=sflag, size = 0x4, scoped, tag = 'scoped memory for tpu_custom_call.1']
    #allocation4 [shape = 's32[1]{0}', space=sflag, size = 0x4, scoped, tag = 'scoped memory for tpu_custom_call.1']
    #allocation5 [shape = 'u8[65536]{0}', space=vmem, size = 0x10000, scoped, tag = 'input window, operand 1, single buffered']
    #allocation6 [shape = 's32[1]{0}', space=sflag, size = 0x4, scoped, tag = 'scoped memory for tpu_custom_call.1']
    #allocation7 [shape = 'u8[32768]{0}', space=vmem, size = 0x8000, scoped, tag = 'input window, operand 3, single buffered']
    #allocation8 [shape = 'u8[8192]{0}', space=vmem, size = 0x2000, scoped, tag = 'output window, operand 0, single buffered']
    %10 = vsyncpa [#allocation3], 0
    %11 = vsyncpa [#allocation6], 0
    %12 = vsyncpa [#allocation4], 0
    // Predicated region
    $region2: #{tpu_custom_call.1} parent=1 // pred_check
      _
    $region3: #{tpu_custom_call.1} parent=1 // pred_check_branch
      %14 = sbr.rel (0) target = $region5
    $region4: #{tpu_custom_call.1} parent=1 // pred_region
      %s16 = ssub.s32 256, 256
      %17 = vsyncadd [#allocation3], %s16
      %s18 = sshll.u32 [#allocation2], 4
      %s19 = int_to_ptr.vmem [resolvable:$true] %s18
      %24 = dma.hbm_to_vmem [thread:$0]  %s0, 256, %s19, [#allocation3], 128, 128, 8
    $region5: #{tpu_custom_call.1} parent=1 // pred_fallthru
      _
    // Predicated region
    $region6: #{tpu_custom_call.1} parent=1 // pred_check
      _
    $region7: #{tpu_custom_call.1} parent=1 // pred_check_branch
      %26 = sbr.rel (0) target = $region9
    $region8: #{tpu_custom_call.1} parent=1 // pred_region
      %s28 = ssub.s32 2048, 2048
      %29 = vsyncadd [#allocation6], %s28
      %s30 = sshll.u32 [#allocation5], 4
      %s31 = int_to_ptr.vmem [resolvable:$true] %s30
      %36 = dma.hbm_to_vmem [thread:$0]  %s1, 2048, %s31, [#allocation6], 64, 64, 4
    $region9: #{tpu_custom_call.1} parent=1 // pred_fallthru
      _
    // Predicated region
    $region10: #{tpu_custom_call.1} parent=1 // pred_check
      _
    $region11: #{tpu_custom_call.1} parent=1 // pred_check_branch
      %38 = sbr.rel (0) target = $region13
    $region12: #{tpu_custom_call.1} parent=1 // pred_region
      _
    $region13: #{tpu_custom_call.1} parent=1 // pred_fallthru
      _
    // Predicated region
    $region14: #{tpu_custom_call.1} parent=1 // pred_check
      _
    $region15: #{tpu_custom_call.1} parent=1 // pred_check_branch
      %40 = sbr.rel (0) target = $region17
    $region16: #{tpu_custom_call.1} parent=1 // pred_region
      %s42 = ssub.s32 1024, 1024
      %43 = vsyncadd [#allocation6], %s42
      %s44 = sshll.u32 [#allocation7], 4
      %s45 = int_to_ptr.vmem [resolvable:$true] %s44
      %50 = dma.hbm_to_vmem [thread:$0]  %s3, 1024, %s45, [#allocation6], 64, 64, 4
    $region17: #{tpu_custom_call.1} parent=1 // pred_fallthru
      _
    // Predicated region
    $region18: #{tpu_custom_call.1} parent=1 // pred_check
      _
    $region19: #{tpu_custom_call.1} parent=1 // pred_check_branch
      %52 = sbr.rel (0) target = $region21
    $region20: #{tpu_custom_call.1} parent=1 // pred_region
      _
    $region21: #{tpu_custom_call.1} parent=1 // pred_fallthru
      _
    // Predicated region
    $region22: #{tpu_custom_call.1} parent=1 // pred_check
      _
    $region23: #{tpu_custom_call.1} parent=1 // pred_check_branch
      %54 = sbr.rel (0) target = $region25
    $region24: #{tpu_custom_call.1} parent=1 // pred_region
      %55 = dma.done [#allocation3], 256
    $region25: #{tpu_custom_call.1} parent=1 // pred_fallthru
      _
    // Predicated region
    $region26: #{tpu_custom_call.1} parent=1 // pred_check
      _
    $region27: #{tpu_custom_call.1} parent=1 // pred_check_branch
      %57 = sbr.rel (0) target = $region29
    $region28: #{tpu_custom_call.1} parent=1 // pred_region
      %58 = dma.done [#allocation6], 2048
    $region29: #{tpu_custom_call.1} parent=1 // pred_fallthru
      _
    // Predicated region
    $region30: #{tpu_custom_call.1} parent=1 // pred_check
      _
    $region31: #{tpu_custom_call.1} parent=1 // pred_check_branch
      %60 = sbr.rel (0) target = $region33
    $region32: #{tpu_custom_call.1} parent=1 // pred_region
      %61 = dma.done [#allocation6], 1024
    $region33: #{tpu_custom_call.1} parent=1 // pred_fallthru
      _
    %v63 = vld [vmem:[#allocation2] sm:$0xff]
    %v64 = vld [vmem:[#allocation2 + $0x8] sm:$0xff]
    %v65 = vld [vmem:[#allocation5] sm:$0xf]
    %v66 = vld [vmem:[#allocation5 + $0x4] sm:$0xf]
    %v67 = vld [vmem:[#allocation5 + $0x8] sm:$0xf]
    %v68 = vld [vmem:[#allocation5 + $0xc] sm:$0xf]
    %v69 = vld [vmem:[#allocation5 + $0x10] sm:$0xf]
    %v70 = vld [vmem:[#allocation5 + $0x14] sm:$0xf]
    %v71 = vld [vmem:[#allocation5 + $0x18] sm:$0xf]
    %v72 = vld [vmem:[#allocation5 + $0x1c] sm:$0xf]
    %v73 = vld [vmem:[#allocation5 + $0x20] sm:$0xf]
    %v74 = vld [vmem:[#allocation5 + $0x24] sm:$0xf]
    %v75 = vld [vmem:[#allocation5 + $0x28] sm:$0xf]
    %v76 = vld [vmem:[#allocation5 + $0x2c] sm:$0xf]
    %v77 = vld [vmem:[#allocation5 + $0x30] sm:$0xf]
    %v78 = vld [vmem:[#allocation5 + $0x34] sm:$0xf]
    %v79 = vld [vmem:[#allocation5 + $0x38] sm:$0xf]
    %v80 = vld [vmem:[#allocation5 + $0x3c] sm:$0xf]
    %v81 = vld [vmem:[#allocation5 + $0x40] sm:$0xf]
    %v82 = vld [vmem:[#allocation5 + $0x44] sm:$0xf]
    %v83 = vld [vmem:[#allocation5 + $0x48] sm:$0xf]
    %v84 = vld [vmem:[#allocation5 + $0x4c] sm:$0xf]
    %v85 = vld [vmem:[#allocation5 + $0x50] sm:$0xf]
    %v86 = vld [vmem:[#allocation5 + $0x54] sm:$0xf]
    %v87 = vld [vmem:[#allocation5 + $0x58] sm:$0xf]
    %v88 = vld [vmem:[#allocation5 + $0x5c] sm:$0xf]
    %v89 = vld [vmem:[#allocation5 + $0x60] sm:$0xf]
    %v90 = vld [vmem:[#allocation5 + $0x64] sm:$0xf]
    %v91 = vld [vmem:[#allocation5 + $0x68] sm:$0xf]
    %v92 = vld [vmem:[#allocation5 + $0x6c] sm:$0xf]
    %v93 = vld [vmem:[#allocation5 + $0x70] sm:$0xf]
    %v94 = vld [vmem:[#allocation5 + $0x74] sm:$0xf]
    %v95 = vld [vmem:[#allocation5 + $0x78] sm:$0xf]
    %v96 = vld [vmem:[#allocation5 + $0x7c] sm:$0xf]
    %v97 = vld [vmem:[%s2] sm:$0x1]
    %v99 = vlaneseq
    %v100 = vshrl.u32 %v99, 7
    %v101 = vsub.s32 0, %v100
    %v102 = vrot.slane %v97, %v101
    %v106 = vunpack.c.l.b16 %v63
    %v107 = vunpack.c.h.b16 %v63
    %v108 = vunpack.c.l.b16 %v64
    %v109 = vunpack.c.h.b16 %v64
    %v110 = vpack.c.b16 %v108, %v106
    %v111 = vpack.c.b16 %v109, %v107
    %v146 = vunpack.c.l.b16 %v65
    %v147 = vunpack.c.l.b16 %v66
    %v148 = vunpack.c.l.b16 %v67
    %v149 = vunpack.c.l.b16 %v68
    %v150 = vunpack.c.l.b16 %v69
    %v151 = vunpack.c.l.b16 %v70
    %v152 = vunpack.c.l.b16 %v71
    %v153 = vunpack.c.l.b16 %v72
    %v154 = vunpack.c.l.b16 %v73
    %v155 = vunpack.c.l.b16 %v74
    %v156 = vunpack.c.l.b16 %v75
    %v157 = vunpack.c.l.b16 %v76
    %v158 = vunpack.c.l.b16 %v77
    %v159 = vunpack.c.l.b16 %v78
    %v160 = vunpack.c.l.b16 %v79
    %v161 = vunpack.c.l.b16 %v80
    %v162 = vunpack.c.l.b16 %v81
    %v163 = vunpack.c.l.b16 %v82
    %v164 = vunpack.c.l.b16 %v83
    %v165 = vunpack.c.l.b16 %v84
    %v166 = vunpack.c.l.b16 %v85
    %v167 = vunpack.c.l.b16 %v86
    %v168 = vunpack.c.l.b16 %v87
    %v169 = vunpack.c.l.b16 %v88
    %v170 = vunpack.c.l.b16 %v89
    %v171 = vunpack.c.l.b16 %v90
    %v172 = vunpack.c.l.b16 %v91
    %v173 = vunpack.c.l.b16 %v92
    %v174 = vunpack.c.l.b16 %v93
    %v175 = vunpack.c.l.b16 %v94
    %v176 = vunpack.c.l.b16 %v95
    %v177 = vunpack.c.l.b16 %v96
    %v178 = vpack.c.b16 %v147, %v146
    %v179 = vpack.c.b16 %v149, %v148
    %v180 = vpack.c.b16 %v151, %v150
    %v181 = vpack.c.b16 %v153, %v152
    %v182 = vpack.c.b16 %v155, %v154
    %v183 = vpack.c.b16 %v157, %v156
    %v184 = vpack.c.b16 %v159, %v158
    %v185 = vpack.c.b16 %v161, %v160
    %v186 = vpack.c.b16 %v163, %v162
    %v187 = vpack.c.b16 %v165, %v164
    %v188 = vpack.c.b16 %v167, %v166
    %v189 = vpack.c.b16 %v169, %v168
    %v190 = vpack.c.b16 %v171, %v170
    %v191 = vpack.c.b16 %v173, %v172
    %v192 = vpack.c.b16 %v175, %v174
    %v193 = vpack.c.b16 %v177, %v176
    %210 = vmatprep.subr.bf16.mxu0 0
    %211 = vmatpush1.bf16.msra.mxu0 %v185
    %212 = vmatprep.subr.bf16.mxu0 0
    %213 = vmatpush1.bf16.msra.mxu0 %v184
    %214 = vmatprep.subr.bf16.mxu0 0
    %215 = vmatpush1.bf16.msra.mxu0 %v183
    %216 = vmatprep.subr.bf16.mxu0 0
    %217 = vmatpush1.bf16.msra.mxu0 %v182
    %218 = vmatprep.subr.bf16.mxu0 0
    %219 = vmatpush1.bf16.msra.mxu0 %v181
    %220 = vmatprep.subr.bf16.mxu0 0
    %221 = vmatpush1.bf16.msra.mxu0 %v180
    %222 = vmatprep.subr.bf16.mxu0 0
    %223 = vmatpush1.bf16.msra.mxu0 %v179
    %224 = vmatprep.subr.bf16.mxu0 0
    %225 = vmatpush1.bf16.msra.mxu0 %v178
    %226 = vmatprep.subr.bf16.mxu0 0
    %227 = vmatpush2.bf16.msra.mxu0 %v193
    %228 = vmatprep.subr.bf16.mxu0 0
    %229 = vmatpush2.bf16.msra.mxu0 %v192
    %230 = vmatprep.subr.bf16.mxu0 0
    %231 = vmatpush2.bf16.msra.mxu0 %v191
    %232 = vmatprep.subr.bf16.mxu0 0
    %233 = vmatpush2.bf16.msra.mxu0 %v190
    %234 = vmatprep.subr.bf16.mxu0 0
    %235 = vmatpush2.bf16.msra.mxu0 %v189
    %236 = vmatprep.subr.bf16.mxu0 0
    %237 = vmatpush2.bf16.msra.mxu0 %v188
    %238 = vmatprep.subr.bf16.mxu0 0
    %239 = vmatpush2.bf16.msra.mxu0 %v187
    %240 = vmatprep.subr.bf16.mxu0 0
    %241 = vmatpush2.bf16.msra.mxu0 %v186
    %242 = vmatprep.mubr.bf16.mxu0 %v111
    %243 = vmatmul.mubr.bf16.gmra.mxu0 %v110
    %v244 = vpop.f32.mrf.mxu0
    %v245 = vadd.f32 %v102, %v244
    %v246 = vpop.f32.mrf.mxu0
    %v247 = vpop.f32.mrf.mxu0
    %v248 = vadd.f32 %v102, %v247
    %v249 = vpop.f32.mrf.mxu0
    %250 = vdwg.mxu0
    %v251 = vmax.f32 %v245, 0.0
    %v252 = vmax.f32 %v248, 0.0
    %v253 = vpack.c.bf16 %v252, %v251
    %v254 = vld [vmem:[#allocation7] sm:$0xf]
    %v255 = vld [vmem:[#allocation7 + $0x4] sm:$0xf]
    %v256 = vld [vmem:[#allocation7 + $0x8] sm:$0xf]
    %v257 = vld [vmem:[#allocation7 + $0xc] sm:$0xf]
    %v258 = vld [vmem:[#allocation7 + $0x10] sm:$0xf]
    %v259 = vld [vmem:[#allocation7 + $0x14] sm:$0xf]
    %v260 = vld [vmem:[#allocation7 + $0x18] sm:$0xf]
    %v261 = vld [vmem:[#allocation7 + $0x1c] sm:$0xf]
    %v262 = vld [vmem:[#allocation7 + $0x20] sm:$0xf]
    %v263 = vld [vmem:[#allocation7 + $0x24] sm:$0xf]
    %v264 = vld [vmem:[#allocation7 + $0x28] sm:$0xf]
    %v265 = vld [vmem:[#allocation7 + $0x2c] sm:$0xf]
    %v266 = vld [vmem:[#allocation7 + $0x30] sm:$0xf]
    %v267 = vld [vmem:[#allocation7 + $0x34] sm:$0xf]
    %v268 = vld [vmem:[#allocation7 + $0x38] sm:$0xf]
    %v269 = vld [vmem:[#allocation7 + $0x3c] sm:$0xf]
    %v270 = vld [vmem:[%s4] sm:$0x1]
    %v272 = vlaneseq
    %v273 = vshrl.u32 %v272, 7
    %v274 = vsub.s32 0, %v273
    %v275 = vrot.slane %v270, %v274
    %v293 = vunpack.c.l.b16 %v254
    %v294 = vunpack.c.l.b16 %v255
    %v295 = vunpack.c.l.b16 %v256
    %v296 = vunpack.c.l.b16 %v257
    %v297 = vunpack.c.l.b16 %v258
    %v298 = vunpack.c.l.b16 %v259
    %v299 = vunpack.c.l.b16 %v260
    %v300 = vunpack.c.l.b16 %v261
    %v301 = vunpack.c.l.b16 %v262
    %v302 = vunpack.c.l.b16 %v263
    %v303 = vunpack.c.l.b16 %v264
    %v304 = vunpack.c.l.b16 %v265
    %v305 = vunpack.c.l.b16 %v266
    %v306 = vunpack.c.l.b16 %v267
    %v307 = vunpack.c.l.b16 %v268
    %v308 = vunpack.c.l.b16 %v269
    %v309 = vpack.c.b16 %v294, %v293
    %v310 = vpack.c.b16 %v296, %v295
    %v311 = vpack.c.b16 %v298, %v297
    %v312 = vpack.c.b16 %v300, %v299
    %v313 = vpack.c.b16 %v302, %v301
    %v314 = vpack.c.b16 %v304, %v303
    %v315 = vpack.c.b16 %v306, %v305
    %v316 = vpack.c.b16 %v308, %v307
    %325 = vmatprep.subr.bf16.mxu0 0
    %326 = vmatpush1.bf16.msra.mxu0 %v316
    %327 = vmatprep.subr.bf16.mxu0 0
    %328 = vmatpush1.bf16.msra.mxu0 %v315
    %329 = vmatprep.subr.bf16.mxu0 0
    %330 = vmatpush1.bf16.msra.mxu0 %v314
    %331 = vmatprep.subr.bf16.mxu0 0
    %332 = vmatpush1.bf16.msra.mxu0 %v313
    %333 = vmatprep.subr.bf16.mxu0 0
    %334 = vmatpush1.bf16.msra.mxu0 %v312
    %335 = vmatprep.subr.bf16.mxu0 0
    %336 = vmatpush1.bf16.msra.mxu0 %v311
    %337 = vmatprep.subr.bf16.mxu0 0
    %338 = vmatpush1.bf16.msra.mxu0 %v310
    %339 = vmatprep.subr.bf16.mxu0 0
    %340 = vmatpush1.bf16.msra.mxu0 %v309
    %341 = vmatprep.subr.bf16.mxu0 0
    %342 = vmatpush2.bf16.msra.mxu0 0
    %343 = vmatprep.subr.bf16.mxu0 0
    %344 = vmatpush2.bf16.msra.mxu0 0
    %345 = vmatprep.subr.bf16.mxu0 0
    %346 = vmatpush2.bf16.msra.mxu0 0
    %347 = vmatprep.subr.bf16.mxu0 0
    %348 = vmatpush2.bf16.msra.mxu0 0
    %349 = vmatprep.subr.bf16.mxu0 0
    %350 = vmatpush2.bf16.msra.mxu0 0
    %351 = vmatprep.subr.bf16.mxu0 0
    %352 = vmatpush2.bf16.msra.mxu0 0
    %353 = vmatprep.subr.bf16.mxu0 0
    %354 = vmatpush2.bf16.msra.mxu0 0
    %355 = vmatprep.subr.bf16.mxu0 0
    %356 = vmatpush2.bf16.msra.mxu0 0
    %357 = vmatprep.mubr.bf16.mxu0 0
    %358 = vmatmul.mubr.bf16.gmra.mxu0 %v253
    %v359 = vpop.f32.mrf.mxu0
    %v360 = vadd.f32 %v275, %v359
    %v361 = vpop.f32.mrf.mxu0
    %v362 = vpop.f32.mrf.mxu0
    %v363 = vadd.f32 %v275, %v362
    %v364 = vpop.f32.mrf.mxu0
    %365 = vdwg.mxu0
    %v366 = vlaneseq
    %v367 = vand.u32 %v366, 127
    %vm368 = vcmp.lt.s32.totalorder %v367, 4
    %v369 = vsel %vm368, %v360, -1e+30
    %v370 = vsel %vm368, %v363, -1e+30
    %371 = vmax.xlane.f32.xlu0 %v369
    %v372 = vpop.xlane.xlu0 %371
    %373 = vmax.xlane.f32.xlu0 %v370
    %v374 = vpop.xlane.xlu0 %373
    %v375 = vsub.f32 %v369, %v372
    %v376 = vsub.f32 %v370, %v374
    %v377 = vmul.f32 %v375, 1.442695
    %v378 = vpow.pop %v377
    %v379 = vmul.f32 %v376, 1.442695
    %v380 = vpow.pop %v379
    %381 = vadd.xlane.f32.xlu0 %v378
    %v382 = vpop.xlane.xlu0 %381
    %383 = vadd.xlane.f32.xlu0 %v380
    %v384 = vpop.xlane.xlu0 %383
    %v385 = vlog2.pop %v382
    %v386 = vmul.f32 %v385, 0.6931472
    %v387 = vlog2.pop %v384
    %v388 = vmul.f32 %v387, 0.6931472
    %v389 = vsub.f32 %v375, %v386
    %v390 = vsub.f32 %v376, %v388
    %391 = vst [vmem:[#allocation8] sm:$0xff] %v389
    %392 = vst [vmem:[#allocation8 + $0x8] sm:$0xff] %v390
    // Predicated region
    $region34: #{tpu_custom_call.1} parent=1 // pred_check
      _
    $region35: #{tpu_custom_call.1} parent=1 // pred_check_branch
      %394 = sbr.rel (0) target = $region37
    $region36: #{tpu_custom_call.1} parent=1 // pred_region
      %s396 = ssub.s32 256, 256
      %397 = vsyncadd [#allocation4], %s396
      %s398 = sshll.u32 [#allocation8], 4
      %s399 = int_to_ptr.vmem [resolvable:$true] %s398
      %404 = dma.vmem_to_hbm [thread:$0]  %s399, 256, %s5, [#allocation4], 128, 128, 8
    $region37: #{tpu_custom_call.1} parent=1 // pred_fallthru
      _
    // Predicated region
    $region38: #{tpu_custom_call.1} parent=1 // pred_check
      _
    $region39: #{tpu_custom_call.1} parent=1 // pred_check_branch
      %406 = sbr.rel (0) target = $region41
    $region40: #{tpu_custom_call.1} parent=1 // pred_region
      %407 = dma.done [#allocation4], 256
    $region41: #{tpu_custom_call.1} parent=1 // pred_fallthru
      _
    %408 = vsyncpa [#allocation3], 1
    %409 = vsyncpa [#allocation6], 1
    %410 = vsyncpa [#allocation4], 1

</llo_original>
